<compile_context>
chip_gen: v7x
topology: tpu7x:2x2x1
jax: 0.10.0
libtpu: 0.0.40
codegen_flags: <defaults>
</compile_context>

<pallas_src>
import functools

import jax
import jax.numpy as jnp
from jax.experimental import pallas as pl
from jax.experimental.pallas import tpu as pltpu


def gaussian_emb_kernel(xp_ref, wq_ref, wl_ref, bias_ref, out_ref):
    """One row-tile of the packed Gaussian-NLL embedding.

    xp_ref   : [TM, P*F]  P consecutive input rows packed along lanes
    wq_ref   : [P*F, P*K] block-diag of (-0.5 / var).T     (resident)
    wl_ref   : [P*F, P*K] block-diag of (mu / var).T        (resident)
    bias_ref : [1,  P*K]  tiled -0.5 * (mu^2/var + log(2*pi*var)).sum(f)
    out_ref  : [TM, P*K]  packed output rows (already negated NLL)
    """
    xp = xp_ref[...].astype(jnp.float32)
    acc = jnp.dot(xp * xp, wq_ref[...], preferred_element_type=jnp.float32)
    acc = acc + jnp.dot(xp, wl_ref[...], preferred_element_type=jnp.float32)
    out_ref[...] = (acc + bias_ref[...]).astype(out_ref.dtype)


@functools.partial(jax.jit, static_argnames=("tile_rows_packed", "out_dtype"))
def rnn_forward(x, mu, var, *, tile_rows_packed=1024, out_dtype=jnp.float32):
    """x: [B, T, F]; mu, var: [K, F]  ->  [B, T, K] (= -NLL per state)."""
    B, T, F = x.shape
    K = mu.shape[0]
    N = B * T

    # Pack factor: make the kernel's output last dim lane-dense (128 lanes).
    P = (128 // K) if (K <= 128 and 128 % K == 0) else 1
    Kp = P * K

    # ---- one-time parameter prep (pure JAX, tiny arrays) --------------------
    iv = (1.0 / var).astype(jnp.float32)                       # [K, F]
    mu_iv = (mu * iv).astype(jnp.float32)                      # [K, F]
    const = jnp.sum(mu * mu * iv + jnp.log(2.0 * jnp.pi * var), axis=-1)  # [K]
    eye_p = jnp.eye(P, dtype=jnp.float32)
    wq_pack = jnp.kron(eye_p, (-0.5 * iv).T)                   # [P*F, P*K]
    wl_pack = jnp.kron(eye_p, mu_iv.T)                         # [P*F, P*K]
    bias_pack = jnp.tile(-0.5 * const, P).reshape(1, Kp).astype(jnp.float32)

    # ---- pack & (if needed) pad the row axis --------------------------------
    Np = pl.cdiv(N, P)                       # packed rows needed
    if Np <= tile_rows_packed:
        tile = Np                            # single block == full dim (legal)
        Np_pad = Np
    else:
        tile = tile_rows_packed              # multiple of 8 (sublane aligned)
        Np_pad = pl.cdiv(Np, tile) * tile

    x_flat = x.reshape(N, F).astype(jnp.float32)
    n_rows_pad = Np_pad * P
    if n_rows_pad != N:
        x_flat = jnp.pad(x_flat, ((0, n_rows_pad - N), (0, 0)))
    xp = x_flat.reshape(Np_pad, P * F)       # free, row-major reshape

    # ---- pallas call ---------------------------------------------------------
    out_pack = pl.pallas_call(
        gaussian_emb_kernel,
        out_shape=jax.ShapeDtypeStruct((Np_pad, Kp), out_dtype),
        grid=(Np_pad // tile,),
        in_specs=[
            pl.BlockSpec((tile, P * F), lambda i: (i, 0)),     # streamed rows
            pl.BlockSpec((P * F, Kp), lambda i: (0, 0)),       # resident weights
            pl.BlockSpec((P * F, Kp), lambda i: (0, 0)),
            pl.BlockSpec((1, Kp), lambda i: (0, 0)),
        ],
        out_specs=pl.BlockSpec((tile, Kp), lambda i: (i, 0)),
        compiler_params=pltpu.CompilerParams(
            dimension_semantics=("parallel",)),                # row tiles independent
    )(xp, wq_pack, wl_pack, bias_pack)

    # Packed [Np_pad, P*K] is bit-identical to row-major [Np_pad*P, K].
    out_flat = out_pack.reshape(Np_pad * P, K)[:N]
    return out_flat.reshape(B, T, K)


def rnn_forward_ref(x, mu, var):
    """Pure-JAX reference of the same semantics (for correctness check)."""
    diff = x[:, :, None, :] - mu[None, None, :, :]             # [B, T, K, F]
    nll = 0.5 * jnp.sum(diff * diff / var[None, None, :, :]
                        + jnp.log(2.0 * jnp.pi * var)[None, None, :, :], axis=-1)
    return -nll


if __name__ == "__main__":
    # Small shapes consistent with the module's forward:
    batch, seq_len, num_features = 2, 8, 4
    emb_dim = 32  # Config().num_states

    key = jax.random.PRNGKey(0)
    kx, kmu, kvar = jax.random.split(key, 3)

    x = jax.random.normal(kx, (batch, seq_len, num_features), dtype=jnp.float32)
    # Deterministic synthetic Gaussian-embedding parameters (no checkpoint load).
    mu = jax.random.normal(kmu, (emb_dim, num_features), dtype=jnp.float32)
    var = 0.5 + jax.nn.softplus(jax.random.normal(kvar, (emb_dim, num_features),
                                                  dtype=jnp.float32))

    out = rnn_forward(x, mu, var)
    out = jax.block_until_ready(out)

    ref = rnn_forward_ref(x, mu, var)
    assert out.shape == (batch, seq_len, emb_dim)
    # Expanded quadratic form vs. diff form: allow a slightly looser tolerance.
    assert jnp.allclose(out, ref, atol=1e-3, rtol=1e-3), "mismatch vs. pure-JAX reference"

    print("KERNEL_OK")
</pallas_src>

<mosaic_0001>
module attributes {stable_mosaic.version = 11 : i64} {
  func.func @gaussian_emb_kernel(%arg0: i32, %arg1: memref<4x16xf32, #tpu.memory_space<vmem>>, %arg2: memref<16x128xf32, #tpu.memory_space<vmem>>, %arg3: memref<16x128xf32, #tpu.memory_space<vmem>>, %arg4: memref<1x128xf32, #tpu.memory_space<vmem>>, %arg5: memref<4x128xf32, #tpu.memory_space<vmem>>) attributes {dimension_semantics = [#tpu.dimension_semantics<parallel>], iteration_bounds = array<i64: 1>, scalar_prefetch = 0 : i64, scratch_operands = 0 : i64, tpu.core_type = #tpu.core_type<tc>, window_params = [{transform_indices = @transform_0, window_bounds = array<i64: 4, 16>}, {pipeline_mode = #tpu.pipeline_mode<synchronous>, transform_indices = @transform_1, window_bounds = array<i64: 16, 128>}, {pipeline_mode = #tpu.pipeline_mode<synchronous>, transform_indices = @transform_2, window_bounds = array<i64: 16, 128>}, {pipeline_mode = #tpu.pipeline_mode<synchronous>, transform_indices = @transform_3, window_bounds = array<i64: 1, 128>}, {transform_indices = @transform_4, window_bounds = array<i64: 4, 128>}]} {
    %c0 = arith.constant 0 : index
    %c0_0 = arith.constant 0 : index
    %0 = vector.load %arg1[%c0, %c0_0] : memref<4x16xf32, #tpu.memory_space<vmem>>, vector<4x16xf32>
    %1 = arith.mulf %0, %0 : vector<4x16xf32>
    %c0_1 = arith.constant 0 : index
    %c0_2 = arith.constant 0 : index
    %2 = vector.load %arg2[%c0_1, %c0_2] : memref<16x128xf32, #tpu.memory_space<vmem>>, vector<16x128xf32>
    %cst = arith.constant dense<0.000000e+00> : vector<4x128xf32>
    %3 = tpu.matmul %1, %2, %cst {dimension_numbers = #tpu.dot_dimension_numbers<[1], [0], [0], [1], [0, 0, 1, 1], [], []>} : vector<4x16xf32>, vector<16x128xf32>, vector<4x128xf32> -> vector<4x128xf32>
    %c0_3 = arith.constant 0 : index
    %c0_4 = arith.constant 0 : index
    %4 = vector.load %arg3[%c0_3, %c0_4] : memref<16x128xf32, #tpu.memory_space<vmem>>, vector<16x128xf32>
    %cst_5 = arith.constant dense<0.000000e+00> : vector<4x128xf32>
    %5 = tpu.matmul %0, %4, %cst_5 {dimension_numbers = #tpu.dot_dimension_numbers<[1], [0], [0], [1], [0, 0, 1, 1], [], []>} : vector<4x16xf32>, vector<16x128xf32>, vector<4x128xf32> -> vector<4x128xf32>
    %6 = arith.addf %3, %5 : vector<4x128xf32>
    %c0_6 = arith.constant 0 : index
    %c0_7 = arith.constant 0 : index
    %7 = vector.load %arg4[%c0_6, %c0_7] : memref<1x128xf32, #tpu.memory_space<vmem>>, vector<1x128xf32>
    %8 = vector.broadcast %7 : vector<1x128xf32> to vector<4x128xf32>
    %9 = arith.addf %6, %8 : vector<4x128xf32>
    %c0_8 = arith.constant 0 : index
    %c0_9 = arith.constant 0 : index
    %10 = vector.load %arg5[%c0_8, %c0_9] : memref<4x128xf32, #tpu.memory_space<vmem>>, vector<4x128xf32>
    tpu.vector_store %arg5[%c0_8, %c0_9], %9 {strides = array<i32>} : memref<4x128xf32, #tpu.memory_space<vmem>>, vector<4x128xf32>,
    return
  }
  func.func @transform_0(%arg0: i32) -> (i32, i32) {
    %c0_i32 = arith.constant 0 : i32
    %c0_i32_0 = arith.constant 0 : i32
    return %arg0, %c0_i32 : i32, i32
  }
  func.func @transform_1(%arg0: i32) -> (i32, i32) {
    %c0_i32 = arith.constant 0 : i32
    %c0_i32_0 = arith.constant 0 : i32
    %c0_i32_1 = arith.constant 0 : i32
    return %c0_i32, %c0_i32_0 : i32, i32
  }
  func.func @transform_2(%arg0: i32) -> (i32, i32) {
    %c0_i32 = arith.constant 0 : i32
    %c0_i32_0 = arith.constant 0 : i32
    %c0_i32_1 = arith.constant 0 : i32
    return %c0_i32, %c0_i32_0 : i32, i32
  }
  func.func @transform_3(%arg0: i32) -> (i32, i32) {
    %c0_i32 = arith.constant 0 : i32
    %c0_i32_0 = arith.constant 0 : i32
    %c0_i32_1 = arith.constant 0 : i32
    return %c0_i32, %c0_i32_0 : i32, i32
  }
  func.func @transform_4(%arg0: i32) -> (i32, i32) {
    %c0_i32 = arith.constant 0 : i32
    %c0_i32_0 = arith.constant 0 : i32
    return %arg0, %c0_i32 : i32, i32
  }
}

</mosaic_0001>

<llo_original>
// kernel: tile.8
$region0: #{tile.8}
  #allocation0 [shape = 's32[1]{0}', space=sflag, size = 0x4, scoped, tag = 'scoped memory for tile.8']
  %s0 = inlined_call_operand.vmem [shape: f32[32], index: 0, kind: input, shape index: {}]
  %s1 = inlined_call_operand.vmem [shape: f32[4,32], index: 1, kind: output, shape index: {}]
  // Predicated region
  $region2: #{tile.8} parent=0 // pred_check
    _
  $region3: #{tile.8} parent=0 // pred_check_branch
    %3 = sbr.rel (0) target = $region5
  $region4: #{tile.8} parent=0 // pred_region
    _
  $region5: #{tile.8} parent=0 // pred_fallthru
    _
  %v4 = vld [vmem:[%s0] ss:$0 sm:$0xff]
  %5 = vst [vmem:[%s1] sm:$0xf] %v4

// kernel: tile.9
$region0: #{tile.9}
  %s0 = inlined_call_operand.vmem [shape: f32[4,32], index: 0, kind: input, shape index: {}]
  %s1 = inlined_call_operand.vmem [shape: f32[1,128], index: 1, kind: output, shape index: {}]
  $region1: #{tile.9} parent=0
    #allocation0 [shape = 'u8[4096]{0}', space=vmem, size = 0x1000, scoped, tag = 'scoped mem for output reshape']
    #allocation1 [shape = 'u8[4096]{0}', space=vmem, size = 0x1000, scoped, tag = 'scoped mem for input reshape']
    %s3 = sshllo.u32 0, 4
    %v4 = vld [vmem:[%s0] sm:%s3]
    %5 = vst [vmem:[#allocation1] sm:%s3] %v4
    %v6 = vld [vmem:[#allocation1] sm:$0x1]
    %vm7 = vcmask 261120
    %8 = vst.msk [vmem:[#allocation0] sm:$0x1] %vm7, %v6
    %s9 = scalar_lea.vmem [#allocation1], 3
    %v10 = vld [vmem:[%s9] sm:$0x1]
    %11 = vrot.lane.b32.xlu0 %v10, 96
    %v12 = vpop.permute.xlu0 %11
    %vm13 = vcmask 1048320
    %14 = vst.msk [vmem:[#allocation0] sm:$0x1] %vm13, %v12
    %s15 = scalar_lea.vmem [#allocation1], 2
    %v16 = vld [vmem:[%s15] sm:$0x1]
    %17 = vrot.lane.b32.xlu0 %v16, 64
    %v18 = vpop.permute.xlu0 %17
    %vm19 = vcmask 785920
    %20 = vst.msk [vmem:[#allocation0] sm:$0x1] %vm19, %v18
    %s21 = scalar_lea.vmem [#allocation1], 1
    %v22 = vld [vmem:[%s21] sm:$0x1]
    %23 = vrot.lane.b32.xlu0 %v22, 32
    %v24 = vpop.permute.xlu0 %23
    %vm25 = vcmask 523520
    %26 = vst.msk [vmem:[#allocation0] sm:$0x1] %vm25, %v24
    %s28 = sshllo.u32 0, 1
    %v30 = vld [vmem:[#allocation0] sm:%s28]
    %s31 = sshllo.u32 0, 1
    %32 = vst [vmem:[%s1] sm:%s31] %v30

// kernel: rnn_forward.1
$region0: #{rnn_forward.1}
  #allocation0 [shape = 'u32[]', space=smem, size = 0x4, offset = 0x4, fixed_abs, tag = 'smem constant byte address 0x4 - core index']
  #allocation1 [shape = 'u32[144,128]{1,0:T(1,128)}', space=vmem, size = 0x12000, scoped, tag = 'internal scratch']
  %s0 = inlined_call_operand.vmem [shape: f32[4,16], index: 0, kind: input, shape index: {}]
  %s1 = inlined_call_operand.vmem [shape: f32[16,128], index: 1, kind: input, shape index: {}]
  %s2 = inlined_call_operand.vmem [shape: f32[16,128], index: 2, kind: input, shape index: {}]
  %s3 = inlined_call_operand.vmem [shape: f32[1,128], index: 3, kind: input, shape index: {}]
  %s4 = inlined_call_operand.vmem [shape: f32[4,128], index: 4, kind: output, shape index: {}]
  %s5 = sld [smem:[#allocation0]]
  $region26: #{rnn_forward.1} parent=0
    _
  %s7 = ssub.s32 1, %s5
  %s8 = scalar_select 0, %s7, %s5
  // Predicated region
  $region2: #{rnn_forward.1} parent=0 // pred_check
    _
  $region3: #{rnn_forward.1} parent=0 // pred_check_branch
    %10 = sbr.rel (0) target = $region5
  $region4: #{rnn_forward.1} parent=0 // pred_region
    _
  $region5: #{rnn_forward.1} parent=0 // pred_fallthru
    _
  // Predicated region
  $region6: #{rnn_forward.1} parent=0 // pred_check
    _
  $region7: #{rnn_forward.1} parent=0 // pred_check_branch
    %12 = sbr.rel (0) target = $region9
  $region8: #{rnn_forward.1} parent=0 // pred_region
    _
  $region9: #{rnn_forward.1} parent=0 // pred_fallthru
    _
  // Predicated region
  $region10: #{rnn_forward.1} parent=0 // pred_check
    _
  $region11: #{rnn_forward.1} parent=0 // pred_check_branch
    %14 = sbr.rel (0) target = $region13
  $region12: #{rnn_forward.1} parent=0 // pred_region
    _
  $region13: #{rnn_forward.1} parent=0 // pred_fallthru
    _
  // Predicated region
  $region14: #{rnn_forward.1} parent=0 // pred_check
    _
  $region15: #{rnn_forward.1} parent=0 // pred_check_branch
    %16 = sbr.rel (0) target = $region17
  $region16: #{rnn_forward.1} parent=0 // pred_region
    _
  $region17: #{rnn_forward.1} parent=0 // pred_fallthru
    _
  %v17 = vld [vmem:[%s0] sm:$0xf]
  %v18 = vmul.f32 %v17, %v17
  %v19 = vld [vmem:[%s1] sm:$0xff]
  %v20 = vld [vmem:[%s1 + $0x8] sm:$0xff]
  %v21 = vld [vmem:[%s2] sm:$0xff]
  %v22 = vld [vmem:[%s2 + $0x8] sm:$0xff]
  %vm23 = vcmask 130048
  %v25 = vsel %vm23, %v17, 0
  %27 = vmatprep.subr.mxu0 0.0
  %28 = vmatpush1.msra.mxu0 %v21
  %29 = vmatprep.subr.mxu0 0.0
  %30 = vmatpush1.msra.mxu0 %v22
  %31 = vmatprep.subr.mxu0 0.0
  %32 = vmatpush1.msra.mxu0 0.0
  %33 = vmatprep.subr.mxu0 0.0
  %34 = vmatpush1.msra.mxu0 0.0
  %35 = vmatprep.subr.mxu0 0.0
  %36 = vmatpush1.msra.mxu0 0.0
  %37 = vmatprep.subr.mxu0 0.0
  %38 = vmatpush1.msra.mxu0 0.0
  %39 = vmatprep.subr.mxu0 0.0
  %40 = vmatpush1.msra.mxu0 0.0
  %41 = vmatprep.subr.mxu0 0.0
  %42 = vmatpush1.msra.mxu0 0.0
  %43 = vmatprep.subr.mxu0 0.0
  %44 = vmatpush1.msra.mxu0 0.0
  %45 = vmatprep.subr.mxu0 0.0
  %46 = vmatpush1.msra.mxu0 0.0
  %47 = vmatprep.subr.mxu0 0.0
  %48 = vmatpush1.msra.mxu0 0.0
  %49 = vmatprep.subr.mxu0 0.0
  %50 = vmatpush1.msra.mxu0 0.0
  %51 = vmatprep.subr.mxu0 0.0
  %52 = vmatpush1.msra.mxu0 0.0
  %53 = vmatprep.subr.mxu0 0.0
  %54 = vmatpush1.msra.mxu0 0.0
  %55 = vmatprep.subr.mxu0 0.0
  %56 = vmatpush1.msra.mxu0 0.0
  %57 = vmatprep.subr.mxu0 0.0
  %58 = vmatpush1.msra.mxu0 0.0
  %59 = vmatprep.subr.mxu0 0.0
  %60 = vmatpush1.msra.mxu0 0.0
  %61 = vmatprep.subr.mxu0 0.0
  %62 = vmatpush1.msra.mxu0 0.0
  %63 = vmatprep.subr.mxu0 0.0
  %64 = vmatpush1.msra.mxu0 0.0
  %65 = vmatprep.subr.mxu0 0.0
  %66 = vmatpush1.msra.mxu0 0.0
  %67 = vmatprep.subr.mxu0 0.0
  %68 = vmatpush1.msra.mxu0 0.0
  %69 = vmatprep.subr.mxu0 0.0
  %70 = vmatpush1.msra.mxu0 0.0
  %71 = vmatprep.subr.mxu0 0.0
  %72 = vmatpush1.msra.mxu0 0.0
  %73 = vmatprep.subr.mxu0 0.0
  %74 = vmatpush1.msra.mxu0 0.0
  %75 = vmatprep.subr.mxu0 0.0
  %76 = vmatpush1.msra.mxu0 0.0
  %77 = vmatprep.subr.mxu0 0.0
  %78 = vmatpush1.msra.mxu0 0.0
  %79 = vmatprep.subr.mxu0 0.0
  %80 = vmatpush1.msra.mxu0 0.0
  %81 = vmatprep.subr.mxu0 0.0
  %82 = vmatpush1.msra.mxu0 0.0
  %83 = vmatprep.subr.mxu0 0.0
  %84 = vmatpush1.msra.mxu0 0.0
  %85 = vmatprep.subr.mxu0 0.0
  %86 = vmatpush1.msra.mxu0 0.0
  %87 = vmatprep.subr.mxu0 0.0
  %88 = vmatpush1.msra.mxu0 0.0
  %89 = vmatprep.subr.mxu0 0.0
  %90 = vmatpush1.msra.mxu0 0.0
  %91 = vmatprep.mubr.f32.mxu0 0.0
  %92 = vmatmul.mubr.f32.gmra.mrb[0].mxu0 %v25
  %v93 = vpop.f32.mrb[0].mxu0
  %v94 = vadd.f32 0.0, %v93
  %v95 = vpop.f32.mrb[0].mxu0
  %96 = vdwg.mxu0
  %v98 = vsel %vm23, %v18, 0
  %100 = vmatprep.subr.mxu0 0.0
  %101 = vmatpush1.msra.mxu0 %v19
  %102 = vmatprep.subr.mxu0 0.0
  %103 = vmatpush1.msra.mxu0 %v20
  %104 = vmatprep.subr.mxu0 0.0
  %105 = vmatpush1.msra.mxu0 0.0
  %106 = vmatprep.subr.mxu0 0.0
  %107 = vmatpush1.msra.mxu0 0.0
  %108 = vmatprep.subr.mxu0 0.0
  %109 = vmatpush1.msra.mxu0 0.0
  %110 = vmatprep.subr.mxu0 0.0
  %111 = vmatpush1.msra.mxu0 0.0
  %112 = vmatprep.subr.mxu0 0.0
  %113 = vmatpush1.msra.mxu0 0.0
  %114 = vmatprep.subr.mxu0 0.0
  %115 = vmatpush1.msra.mxu0 0.0
  %116 = vmatprep.subr.mxu0 0.0
  %117 = vmatpush1.msra.mxu0 0.0
  %118 = vmatprep.subr.mxu0 0.0
  %119 = vmatpush1.msra.mxu0 0.0
  %120 = vmatprep.subr.mxu0 0.0
  %121 = vmatpush1.msra.mxu0 0.0
  %122 = vmatprep.subr.mxu0 0.0
  %123 = vmatpush1.msra.mxu0 0.0
  %124 = vmatprep.subr.mxu0 0.0
  %125 = vmatpush1.msra.mxu0 0.0
  %126 = vmatprep.subr.mxu0 0.0
  %127 = vmatpush1.msra.mxu0 0.0
  %128 = vmatprep.subr.mxu0 0.0
  %129 = vmatpush1.msra.mxu0 0.0
  %130 = vmatprep.subr.mxu0 0.0
  %131 = vmatpush1.msra.mxu0 0.0
  %132 = vmatprep.subr.mxu0 0.0
  %133 = vmatpush1.msra.mxu0 0.0
  %134 = vmatprep.subr.mxu0 0.0
  %135 = vmatpush1.msra.mxu0 0.0
  %136 = vmatprep.subr.mxu0 0.0
  %137 = vmatpush1.msra.mxu0 0.0
  %138 = vmatprep.subr.mxu0 0.0
  %139 = vmatpush1.msra.mxu0 0.0
  %140 = vmatprep.subr.mxu0 0.0
  %141 = vmatpush1.msra.mxu0 0.0
  %142 = vmatprep.subr.mxu0 0.0
  %143 = vmatpush1.msra.mxu0 0.0
  %144 = vmatprep.subr.mxu0 0.0
  %145 = vmatpush1.msra.mxu0 0.0
  %146 = vmatprep.subr.mxu0 0.0
  %147 = vmatpush1.msra.mxu0 0.0
  %148 = vmatprep.subr.mxu0 0.0
  %149 = vmatpush1.msra.mxu0 0.0
  %150 = vmatprep.subr.mxu0 0.0
  %151 = vmatpush1.msra.mxu0 0.0
  %152 = vmatprep.subr.mxu0 0.0
  %153 = vmatpush1.msra.mxu0 0.0
  %154 = vmatprep.subr.mxu0 0.0
  %155 = vmatpush1.msra.mxu0 0.0
  %156 = vmatprep.subr.mxu0 0.0
  %157 = vmatpush1.msra.mxu0 0.0
  %158 = vmatprep.subr.mxu0 0.0
  %159 = vmatpush1.msra.mxu0 0.0
  %160 = vmatprep.subr.mxu0 0.0
  %161 = vmatpush1.msra.mxu0 0.0
  %162 = vmatprep.subr.mxu0 0.0
  %163 = vmatpush1.msra.mxu0 0.0
  %164 = vmatprep.mubr.f32.mxu0 0.0
  %165 = vmatmul.mubr.f32.gmra.mrb[0].mxu0 %v98
  %v166 = vpop.f32.mrb[0].mxu0
  %v167 = vadd.f32 %v94, %v166
  %v168 = vpop.f32.mrb[0].mxu0
  %169 = vdwg.mxu0
  %v170 = vld [vmem:[%s3] sm:$0x1]
  %v172 = vlaneseq
  %v173 = vshrl.u32 %v172, 7
  %v174 = vsub.s32 0, %v173
  %v175 = vrot.slane %v170, %v174
  %v177 = vadd.f32 %v167, %v175
  %178 = vst [vmem:[%s4] sm:$0xf] %v177
  // Predicated region
  $region18: #{rnn_forward.1} parent=0 // pred_check
    _
  $region19: #{rnn_forward.1} parent=0 // pred_check_branch
    %180 = sbr.rel (0) target = $region21
  $region20: #{rnn_forward.1} parent=0 // pred_region
    _
  $region21: #{rnn_forward.1} parent=0 // pred_fallthru
    _
  // Predicated region
  $region22: #{rnn_forward.1} parent=0 // pred_check
    _
  $region23: #{rnn_forward.1} parent=0 // pred_check_branch
    %182 = sbr.rel (0) target = $region25
  $region24: #{rnn_forward.1} parent=0 // pred_region
    _
  $region25: #{rnn_forward.1} parent=0 // pred_fallthru
    _

</llo_original>
